<compile_context>
chip_gen: v5e
topology: v5e:2x2
jax: 0.10.0
libtpu: 0.0.40
codegen_flags: <defaults>
</compile_context>

<pallas_src>
import numpy as np
import jax
import jax.numpy as jnp
from jax.experimental import pallas as pl
from jax.experimental.pallas import tpu as pltpu


# ---------------------------------------------------------------------------
# DFrFT eigenbasis (static per size N) -- host-side parameter setup, not kernel.
# ---------------------------------------------------------------------------
def _dfrft_eigenbasis(N: int):
    # Hamiltonian S (second-order approx) commuting with the DFT.
    s = np.zeros(N, dtype=np.float64)
    s[1] = 1.0
    s[N - 1] = 1.0
    circ_idx = (np.arange(N)[:, None] - np.arange(N)[None, :]) % N
    S = s[circ_idx] + np.diag(np.real(np.fft.fft(s)))

    # Even/odd decomposition matrix P.
    P = np.zeros((N, N), dtype=np.float64)
    P[0, 0] = 1.0
    r = N // 2
    even = (N % 2 == 0)
    v = 1.0 / np.sqrt(2.0)
    for i in range(1, r + 1 - int(even)):
        P[i, i] = v
        P[i, N - i] = v
    if even:
        P[r, r] = 1.0
    for i in range(r + 1, N):
        P[i, i] = -v
        P[i, N - i] = v

    CS = P @ S @ P.T
    n_even = r + 1
    C2 = CS[:n_even, :n_even]
    S2 = CS[n_even:, n_even:]

    _, vc = np.linalg.eigh(C2)           # ascending eigenvalues
    _, vs = np.linalg.eigh(S2)
    vc = vc[:, ::-1]                     # descending -> increasing Hermite idx
    vs = vs[:, ::-1] if vs.size else vs

    SC2 = P @ np.vstack([vc, np.zeros((N - n_even, n_even))])
    SS2 = P @ np.vstack([np.zeros((n_even, N - n_even)), vs])

    if even:
        E = np.zeros((N, N + 1))
        SS2p = np.hstack([SS2, np.zeros((N, 1))])
        E[:, 0::2] = SC2
        E[:, 1::2] = SS2p
        E = np.delete(E, N - 1, axis=1)  # drop the padded zero column
    else:
        E = np.zeros((N, N))
        E[:, 0::2] = SC2
        E[:, 1::2] = SS2

    shift = 1 - (N % 2)                  # even N: indices 0..N-2, N
    idx = np.concatenate([np.arange(N - 1), [N - 1 + shift]]).astype(np.float64)
    return E.astype(np.float32), idx.astype(np.float32)


def dfrft_matrices(N: int, order, fold_fftshift: bool = True):
    """Real/imag parts of the N x N discrete fractional Fourier matrix.

    If fold_fftshift, rows are pre-rolled by N//2 so applying the matrix yields
    fftshift(dfrft(x)) along that dim directly.
    """
    E_np, idx_np = _dfrft_eigenbasis(N)
    E = jnp.asarray(E_np, jnp.float32)
    idx = jnp.asarray(idx_np, jnp.float32)
    phase = -(jnp.asarray(order, jnp.float32) * (jnp.pi / 2.0)) * idx
    # F = E diag(exp(i*phase)) E^T   (E is real)
    Fr = (E * jnp.cos(phase)[None, :]) @ E.T
    Fi = (E * jnp.sin(phase)[None, :]) @ E.T
    if fold_fftshift:
        Fr = jnp.roll(Fr, N // 2, axis=0)
        Fi = jnp.roll(Fi, N // 2, axis=0)
    return Fr.astype(jnp.float32), Fi.astype(jnp.float32)


def _dfrft_pool_kron(order1, order2, H: int, W: int):
    """(H*W, n_pad) Kronecker matrices with fftshift + centre-crop folded in."""
    ar, ai = dfrft_matrices(W, order1)            # transform along dim -1
    br, bi = dfrft_matrices(H, order2)            # transform along dim -2
    st_H = H // 4 + 1
    end_H = H - st_H + 1
    st_W = W // 4 + 1
    end_W = W - st_W + 1
    brc, bic = br[st_H:end_H, :], bi[st_H:end_H, :]   # (h_out, H)
    arc, aic = ar[st_W:end_W, :], ai[st_W:end_W, :]   # (w_out, W)
    h_out, w_out = brc.shape[0], arc.shape[0]
    # Cropped 2-D transform of real x with complex A, B:
    #   out[a,b] = sum_{h,w} B[a,h] A[b,w] x[h,w]
    kr = (jnp.einsum('ah,bw->abhw', brc, arc)
          - jnp.einsum('ah,bw->abhw', bic, aic))
    ki = (jnp.einsum('ah,bw->abhw', brc, aic)
          + jnp.einsum('ah,bw->abhw', bic, arc))
    n_out = h_out * w_out
    kr = kr.reshape(n_out, H * W).T               # (H*W, n_out): x_flat @ Kr
    ki = ki.reshape(n_out, H * W).T
    n_pad = ((n_out + 127) // 128) * 128          # lane-dense output width
    if n_pad != n_out:
        kr = jnp.pad(kr, ((0, 0), (0, n_pad - n_out)))
        ki = jnp.pad(ki, ((0, 0), (0, n_pad - n_out)))
    return kr, ki, h_out, w_out, n_pad


def _num_tensorcores() -> int:
    """Best-effort TensorCore count (2 on v7x, 1 on v5e/v6e); defaults to 1."""
    try:
        info = pltpu.get_tpu_info()
        for attr in ("num_cores", "core_count", "num_tensorcores",
                     "tensorcores_per_chip"):
            v = getattr(info, attr, None)
            if v:
                return max(1, int(v))
    except Exception:
        pass
    return 1


# ---------------------------------------------------------------------------
# Pallas kernel: cropped 2-D DFrFT magnitude for a block of tb slices.
# ---------------------------------------------------------------------------
def _dfrft_pool_kernel(x_ref, kr_ref, ki_ref, o_ref):
    x = x_ref[...]                                            # (tb, H*W) bf16
    # Two MXU matmuls: K = H*W (=256), N = n_pad (=128) — MXU-shaped tiles.
    zr = jnp.dot(x, kr_ref[...], preferred_element_type=jnp.float32)
    zi = jnp.dot(x, ki_ref[...], preferred_element_type=jnp.float32)
    s = zr * zr + zi * zi
    # |z| = s * rsqrt(s): the root goes to the EUP slot, not the VPU.
    o_ref[...] = s * jax.lax.rsqrt(jnp.maximum(s, 1e-30))


def dfrft_pool(x, order1, order2, *, compute_dtype=jnp.bfloat16,
               vmem_budget_bytes=24 * 1024 * 1024):
    """JAX/Pallas equivalent of DFrFTPool.forward. x: (B, C, H, W)."""
    B, C, H, W = x.shape
    BC = B * C
    HW = H * W

    # fftshift + crop folded into the Kronecker matrices (host-side setup).
    kr, ki, h_out, w_out, n_pad = _dfrft_pool_kron(order1, order2, H, W)
    kr = kr.astype(compute_dtype)
    ki = ki.astype(compute_dtype)

    itemsize = np.dtype(compute_dtype).itemsize
    sublane = 8 if itemsize >= 4 else 16          # native sublane tile height
    # Per-slice VMEM: double-buffered in/out blocks + ~3 f32 intermediates.
    slice_vmem = 2 * (HW * itemsize + n_pad * 4) + 3 * n_pad * 4
    tb_cap = max(sublane,
                 min(8192, vmem_budget_bytes // slice_vmem) // sublane * sublane)

    n_blocks = -(-BC // tb_cap)
    n_tc = _num_tensorcores()
    if n_tc > 1 and BC >= 16 * n_tc:
        n_blocks = max(n_blocks, n_tc)            # shard across TCs (v7x only)
    tb = (-(-BC // n_blocks) + sublane - 1) // sublane * sublane
    n_blocks = -(-BC // tb)
    bc_pad = n_blocks * tb

    x2 = x.reshape(BC, HW).astype(compute_dtype)
    if bc_pad != BC:
        # TODO(synk): a pl.when-guarded / masked tail store could skip the <=1
        # padded block of wasted work; with MiB-sized blocks it is noise.
        x2 = jnp.pad(x2, ((0, bc_pad - BC), (0, 0)))

    out_flat = pl.pallas_call(
        _dfrft_pool_kernel,
        out_shape=jax.ShapeDtypeStruct((bc_pad, n_pad), jnp.float32),
        grid_spec=pltpu.PrefetchScalarGridSpec(
            num_scalar_prefetch=0,
            grid=(n_blocks,),
            in_specs=[
                pl.BlockSpec((tb, HW), lambda i: (i, 0)),     # tb input slices
                pl.BlockSpec((HW, n_pad), lambda i: (0, 0)),  # Kr (real Kron)
                pl.BlockSpec((HW, n_pad), lambda i: (0, 0)),  # Ki (imag Kron)
            ],
            out_specs=pl.BlockSpec((tb, n_pad), lambda i: (i, 0)),
        ),
        compiler_params=pltpu.CompilerParams(
            dimension_semantics=("parallel",),
            vmem_limit_bytes=32 * 1024 * 1024,    # safe on v5e/v6e/v7x alike
        ),
    )(x2, kr, ki)

    # fftshift and the centre crop are inside the matrices; only reshape left.
    return out_flat[:BC, :h_out * w_out].reshape(B, C, h_out, w_out)


# ---------------------------------------------------------------------------
# Pure-JAX reference (unfused: complex matmuls + explicit fftshift + crop).
# ---------------------------------------------------------------------------
def _reference_dfrft_pool(x, order1, order2):
    B, C, H, W = x.shape
    ar, ai = dfrft_matrices(W, order1, fold_fftshift=False)
    br, bi = dfrft_matrices(H, order2, fold_fftshift=False)
    A = ar + 1j * ai
    Bm = br + 1j * bi
    xc = x.astype(jnp.complex64)
    out = jnp.einsum('ab,nchb->ncha', A, xc, precision='highest')    # dim -1
    out = jnp.einsum('ab,ncbw->ncaw', Bm, out, precision='highest')  # dim -2
    out = jnp.roll(out, W // 2, axis=-1)
    out = jnp.roll(out, H // 2, axis=-2)
    st_H = H // 4 + 1
    end_H = H - st_H + 1
    st_W = W // 4 + 1
    end_W = W - st_W + 1
    return jnp.abs(out[..., st_H:end_H, st_W:end_W]).astype(jnp.float32)


if __name__ == "__main__":
    key = jax.random.PRNGKey(0)
    # NCHW input, matching the PyTorch module's convention.
    x = jax.random.normal(key, (2, 4, 16, 16), dtype=jnp.float32)

    # Deterministic parameter init: DFrFTPool(order=1) -> order1 = order2 = 1.0
    order1 = jnp.asarray(1.0, jnp.float32)
    order2 = jnp.asarray(1.0, jnp.float32)

    out = jax.block_until_ready(dfrft_pool(x, order1, order2))

    # H = W = 16 -> crop rows/cols 5:12 -> (2, 4, 7, 7)
    assert out.shape == (2, 4, 7, 7), out.shape
    assert out.dtype == jnp.float32
    assert bool(jnp.all(jnp.isfinite(out)))

    # Check the fused (Kronecker, fftshift- and crop-folded, bf16-operand)
    # kernel against the unfused complex64 reference. Tolerance accounts for
    # bf16 operand rounding (f32 accumulation keeps worst case ~1e-2 absolute).
    ref = jax.block_until_ready(_reference_dfrft_pool(x, order1, order2))
    assert bool(jnp.allclose(out, ref, rtol=3e-2, atol=3e-2)), \
        float(jnp.max(jnp.abs(out - ref)))

    print("KERNEL_OK")
</pallas_src>

<mosaic_0001>
module attributes {stable_mosaic.version = 11 : i64} {
  func.func @_dfrft_pool_kernel(%arg0: i32, %arg1: memref<16x256xbf16, #tpu.memory_space<vmem>>, %arg2: memref<256x128xbf16, #tpu.memory_space<vmem>>, %arg3: memref<256x128xbf16, #tpu.memory_space<vmem>>, %arg4: memref<16x128xf32, #tpu.memory_space<vmem>>) attributes {dimension_semantics = [#tpu.dimension_semantics<parallel>], iteration_bounds = array<i64: 1>, scalar_prefetch = 0 : i64, scratch_operands = 0 : i64, tpu.core_type = #tpu.core_type<tc>, window_params = [{transform_indices = @transform_0, window_bounds = array<i64: 16, 256>}, {pipeline_mode = #tpu.pipeline_mode<synchronous>, transform_indices = @transform_1, window_bounds = array<i64: 256, 128>}, {pipeline_mode = #tpu.pipeline_mode<synchronous>, transform_indices = @transform_2, window_bounds = array<i64: 256, 128>}, {transform_indices = @transform_3, window_bounds = array<i64: 16, 128>}]} {
    %c0 = arith.constant 0 : index
    %c0_0 = arith.constant 0 : index
    %0 = vector.load %arg1[%c0, %c0_0] : memref<16x256xbf16, #tpu.memory_space<vmem>>, vector<16x256xbf16>
    %c0_1 = arith.constant 0 : index
    %c0_2 = arith.constant 0 : index
    %1 = vector.load %arg2[%c0_1, %c0_2] : memref<256x128xbf16, #tpu.memory_space<vmem>>, vector<256x128xbf16>
    %cst = arith.constant dense<0.000000e+00> : vector<16x128xf32>
    %2 = tpu.matmul %0, %1, %cst {dimension_numbers = #tpu.dot_dimension_numbers<[1], [0], [0], [1], [0, 0, 1, 1], [], []>} : vector<16x256xbf16>, vector<256x128xbf16>, vector<16x128xf32> -> vector<16x128xf32>
    %c0_3 = arith.constant 0 : index
    %c0_4 = arith.constant 0 : index
    %3 = vector.load %arg3[%c0_3, %c0_4] : memref<256x128xbf16, #tpu.memory_space<vmem>>, vector<256x128xbf16>
    %cst_5 = arith.constant dense<0.000000e+00> : vector<16x128xf32>
    %4 = tpu.matmul %0, %3, %cst_5 {dimension_numbers = #tpu.dot_dimension_numbers<[1], [0], [0], [1], [0, 0, 1, 1], [], []>} : vector<16x256xbf16>, vector<256x128xbf16>, vector<16x128xf32> -> vector<16x128xf32>
    %5 = arith.mulf %2, %2 : vector<16x128xf32>
    %6 = arith.mulf %4, %4 : vector<16x128xf32>
    %7 = arith.addf %5, %6 : vector<16x128xf32>
    %cst_6 = arith.constant 1.000000e-30 : f32
    %8 = vector.broadcast %cst_6 : f32 to vector<16x128xf32>
    %9 = arith.maximumf %7, %8 : vector<16x128xf32>
    %10 = math.rsqrt %9 : vector<16x128xf32>
    %11 = arith.mulf %7, %10 : vector<16x128xf32>
    %c0_7 = arith.constant 0 : index
    %c0_8 = arith.constant 0 : index
    %12 = vector.load %arg4[%c0_7, %c0_8] : memref<16x128xf32, #tpu.memory_space<vmem>>, vector<16x128xf32>
    tpu.vector_store %arg4[%c0_7, %c0_8], %11 {strides = array<i32>} : memref<16x128xf32, #tpu.memory_space<vmem>>, vector<16x128xf32>,
    return
  }
  func.func @transform_0(%arg0: i32) -> (i32, i32) {
    %c0_i32 = arith.constant 0 : i32
    %c0_i32_0 = arith.constant 0 : i32
    return %arg0, %c0_i32 : i32, i32
  }
  func.func @transform_1(%arg0: i32) -> (i32, i32) {
    %c0_i32 = arith.constant 0 : i32
    %c0_i32_0 = arith.constant 0 : i32
    %c0_i32_1 = arith.constant 0 : i32
    return %c0_i32, %c0_i32_0 : i32, i32
  }
  func.func @transform_2(%arg0: i32) -> (i32, i32) {
    %c0_i32 = arith.constant 0 : i32
    %c0_i32_0 = arith.constant 0 : i32
    %c0_i32_1 = arith.constant 0 : i32
    return %c0_i32, %c0_i32_0 : i32, i32
  }
  func.func @transform_3(%arg0: i32) -> (i32, i32) {
    %c0_i32 = arith.constant 0 : i32
    %c0_i32_0 = arith.constant 0 : i32
    return %arg0, %c0_i32 : i32, i32
  }
}

</mosaic_0001>

<llo_original>
// kernel: tpu_custom_call.1
$region0: #{tpu_custom_call.1}
  #allocation0 [shape = 'u32[]', space=smem, size = 0x4, offset = 0x4, fixed_abs, tag = 'smem constant byte address 0x4 - core index']
  #allocation1 [shape = 'u32[72,128]{1,0:T(1,128)}', space=vmem, size = 0x9000, scoped, tag = 'internal scratch']
  %s0 = inlined_call_operand.hbm [shape: bf16[16,256], index: 0, kind: input, shape index: {}]
  %s1 = inlined_call_operand.hbm [shape: bf16[256,128], index: 1, kind: input, shape index: {}]
  %s2 = inlined_call_operand.hbm [shape: bf16[256,128], index: 2, kind: input, shape index: {}]
  %s3 = inlined_call_operand.hbm [shape: f32[16,128], index: 3, kind: output, shape index: {}]
  %s4 = sld [smem:[#allocation0]]
  $region34: #{tpu_custom_call.1} parent=0
    _
  %s6 = ssub.s32 1, %s4
  %s7 = scalar_select 0, %s6, %s4
  $region1: #{tpu_custom_call.1} parent=0
    #allocation2 [shape = 'u8[8192]{0}', space=vmem, size = 0x2000, scoped, tag = 'input window, operand 0, single buffered']
    #allocation3 [shape = 's32[1]{0}', space=sflag, size = 0x4, scoped, tag = 'scoped memory for tpu_custom_call.1']
    #allocation4 [shape = 's32[1]{0}', space=sflag, size = 0x4, scoped, tag = 'scoped memory for tpu_custom_call.1']
    #allocation5 [shape = 'u8[65536]{0}', space=vmem, size = 0x10000, scoped, tag = 'input window, operand 1, single buffered']
    #allocation6 [shape = 's32[1]{0}', space=sflag, size = 0x4, scoped, tag = 'scoped memory for tpu_custom_call.1']
    #allocation7 [shape = 'u8[65536]{0}', space=vmem, size = 0x10000, scoped, tag = 'input window, operand 2, single buffered']
    #allocation8 [shape = 'u8[8192]{0}', space=vmem, size = 0x2000, scoped, tag = 'output window, operand 0, single buffered']
    %8 = vsyncpa [#allocation3], 0
    %9 = vsyncpa [#allocation6], 0
    %10 = vsyncpa [#allocation4], 0
    // Predicated region
    $region2: #{tpu_custom_call.1} parent=1 // pred_check
      _
    $region3: #{tpu_custom_call.1} parent=1 // pred_check_branch
      %12 = sbr.rel (0) target = $region5
    $region4: #{tpu_custom_call.1} parent=1 // pred_region
      %14 = vsyncadd [#allocation3], 0
      %s15 = sshll.u32 %s0, 4
      %s16 = int_to_ptr.hbm [resolvable:$true] %s15
      %s17 = sshll.u32 [#allocation2], 4
      %s18 = int_to_ptr.vmem [resolvable:$true] %s17
      %23 = dma.hbm_to_vmem [thread:$0]  %s16, 256, %s18, [#allocation3], 128, 128, 8
    $region5: #{tpu_custom_call.1} parent=1 // pred_fallthru
      _
    // Predicated region
    $region6: #{tpu_custom_call.1} parent=1 // pred_check
      _
    $region7: #{tpu_custom_call.1} parent=1 // pred_check_branch
      %25 = sbr.rel (0) target = $region9
    $region8: #{tpu_custom_call.1} parent=1 // pred_region
      %27 = vsyncadd [#allocation6], 0
      %s28 = sshll.u32 %s1, 4
      %s29 = int_to_ptr.hbm [resolvable:$true] %s28
      %s30 = sshll.u32 [#allocation5], 4
      %s31 = int_to_ptr.vmem [resolvable:$true] %s30
      %36 = dma.hbm_to_vmem [thread:$0]  %s29, 2048, %s31, [#allocation6], 64, 64, 4
    $region9: #{tpu_custom_call.1} parent=1 // pred_fallthru
      _
    // Predicated region
    $region10: #{tpu_custom_call.1} parent=1 // pred_check
      _
    $region11: #{tpu_custom_call.1} parent=1 // pred_check_branch
      %38 = sbr.rel (0) target = $region13
    $region12: #{tpu_custom_call.1} parent=1 // pred_region
      %40 = vsyncadd [#allocation6], 0
      %s41 = sshll.u32 %s2, 4
      %s42 = int_to_ptr.hbm [resolvable:$true] %s41
      %s43 = sshll.u32 [#allocation7], 4
      %s44 = int_to_ptr.vmem [resolvable:$true] %s43
      %49 = dma.hbm_to_vmem [thread:$0]  %s42, 2048, %s44, [#allocation6], 64, 64, 4
    $region13: #{tpu_custom_call.1} parent=1 // pred_fallthru
      _
    // Predicated region
    $region14: #{tpu_custom_call.1} parent=1 // pred_check
      _
    $region15: #{tpu_custom_call.1} parent=1 // pred_check_branch
      %51 = sbr.rel (0) target = $region17
    $region16: #{tpu_custom_call.1} parent=1 // pred_region
      %53 = dma.done [#allocation3], 256
    $region17: #{tpu_custom_call.1} parent=1 // pred_fallthru
      _
    // Predicated region
    $region18: #{tpu_custom_call.1} parent=1 // pred_check
      _
    $region19: #{tpu_custom_call.1} parent=1 // pred_check_branch
      %55 = sbr.rel (0) target = $region21
    $region20: #{tpu_custom_call.1} parent=1 // pred_region
      %57 = dma.done [#allocation6], 2048
    $region21: #{tpu_custom_call.1} parent=1 // pred_fallthru
      _
    // Predicated region
    $region22: #{tpu_custom_call.1} parent=1 // pred_check
      _
    $region23: #{tpu_custom_call.1} parent=1 // pred_check_branch
      %59 = sbr.rel (0) target = $region25
    $region24: #{tpu_custom_call.1} parent=1 // pred_region
      %61 = dma.done [#allocation6], 2048
    $region25: #{tpu_custom_call.1} parent=1 // pred_fallthru
      _
    %v62 = vld [vmem:[#allocation2] sm:$0xff]
    %v63 = vld [vmem:[#allocation2 + $0x8] sm:$0xff]
    %v64 = vld [vmem:[#allocation5] sm:$0xf]
    %v65 = vld [vmem:[#allocation5 + $0x4] sm:$0xf]
    %v66 = vld [vmem:[#allocation5 + $0x8] sm:$0xf]
    %v67 = vld [vmem:[#allocation5 + $0xc] sm:$0xf]
    %v68 = vld [vmem:[#allocation5 + $0x10] sm:$0xf]
    %v69 = vld [vmem:[#allocation5 + $0x14] sm:$0xf]
    %v70 = vld [vmem:[#allocation5 + $0x18] sm:$0xf]
    %v71 = vld [vmem:[#allocation5 + $0x1c] sm:$0xf]
    %v72 = vld [vmem:[#allocation5 + $0x20] sm:$0xf]
    %v73 = vld [vmem:[#allocation5 + $0x24] sm:$0xf]
    %v74 = vld [vmem:[#allocation5 + $0x28] sm:$0xf]
    %v75 = vld [vmem:[#allocation5 + $0x2c] sm:$0xf]
    %v76 = vld [vmem:[#allocation5 + $0x30] sm:$0xf]
    %v77 = vld [vmem:[#allocation5 + $0x34] sm:$0xf]
    %v78 = vld [vmem:[#allocation5 + $0x38] sm:$0xf]
    %v79 = vld [vmem:[#allocation5 + $0x3c] sm:$0xf]
    %v80 = vld [vmem:[#allocation5 + $0x40] sm:$0xf]
    %v81 = vld [vmem:[#allocation5 + $0x44] sm:$0xf]
    %v82 = vld [vmem:[#allocation5 + $0x48] sm:$0xf]
    %v83 = vld [vmem:[#allocation5 + $0x4c] sm:$0xf]
    %v84 = vld [vmem:[#allocation5 + $0x50] sm:$0xf]
    %v85 = vld [vmem:[#allocation5 + $0x54] sm:$0xf]
    %v86 = vld [vmem:[#allocation5 + $0x58] sm:$0xf]
    %v87 = vld [vmem:[#allocation5 + $0x5c] sm:$0xf]
    %v88 = vld [vmem:[#allocation5 + $0x60] sm:$0xf]
    %v89 = vld [vmem:[#allocation5 + $0x64] sm:$0xf]
    %v90 = vld [vmem:[#allocation5 + $0x68] sm:$0xf]
    %v91 = vld [vmem:[#allocation5 + $0x6c] sm:$0xf]
    %v92 = vld [vmem:[#allocation5 + $0x70] sm:$0xf]
    %v93 = vld [vmem:[#allocation5 + $0x74] sm:$0xf]
    %v94 = vld [vmem:[#allocation5 + $0x78] sm:$0xf]
    %v95 = vld [vmem:[#allocation5 + $0x7c] sm:$0xf]
    %v98 = vunpack.c.l.b16 %v62
    %v99 = vunpack.c.h.b16 %v62
    %v100 = vunpack.c.l.b16 %v63
    %v101 = vunpack.c.h.b16 %v63
    %v102 = vpack.c.b16 %v100, %v98
    %v103 = vpack.c.b16 %v101, %v99
    %v138 = vunpack.c.l.b16 %v64
    %v139 = vunpack.c.l.b16 %v65
    %v140 = vunpack.c.l.b16 %v66
    %v141 = vunpack.c.l.b16 %v67
    %v142 = vunpack.c.l.b16 %v68
    %v143 = vunpack.c.l.b16 %v69
    %v144 = vunpack.c.l.b16 %v70
    %v145 = vunpack.c.l.b16 %v71
    %v146 = vunpack.c.l.b16 %v72
    %v147 = vunpack.c.l.b16 %v73
    %v148 = vunpack.c.l.b16 %v74
    %v149 = vunpack.c.l.b16 %v75
    %v150 = vunpack.c.l.b16 %v76
    %v151 = vunpack.c.l.b16 %v77
    %v152 = vunpack.c.l.b16 %v78
    %v153 = vunpack.c.l.b16 %v79
    %v154 = vunpack.c.l.b16 %v80
    %v155 = vunpack.c.l.b16 %v81
    %v156 = vunpack.c.l.b16 %v82
    %v157 = vunpack.c.l.b16 %v83
    %v158 = vunpack.c.l.b16 %v84
    %v159 = vunpack.c.l.b16 %v85
    %v160 = vunpack.c.l.b16 %v86
    %v161 = vunpack.c.l.b16 %v87
    %v162 = vunpack.c.l.b16 %v88
    %v163 = vunpack.c.l.b16 %v89
    %v164 = vunpack.c.l.b16 %v90
    %v165 = vunpack.c.l.b16 %v91
    %v166 = vunpack.c.l.b16 %v92
    %v167 = vunpack.c.l.b16 %v93
    %v168 = vunpack.c.l.b16 %v94
    %v169 = vunpack.c.l.b16 %v95
    %v170 = vpack.c.b16 %v139, %v138
    %v171 = vpack.c.b16 %v141, %v140
    %v172 = vpack.c.b16 %v143, %v142
    %v173 = vpack.c.b16 %v145, %v144
    %v174 = vpack.c.b16 %v147, %v146
    %v175 = vpack.c.b16 %v149, %v148
    %v176 = vpack.c.b16 %v151, %v150
    %v177 = vpack.c.b16 %v153, %v152
    %v178 = vpack.c.b16 %v155, %v154
    %v179 = vpack.c.b16 %v157, %v156
    %v180 = vpack.c.b16 %v159, %v158
    %v181 = vpack.c.b16 %v161, %v160
    %v182 = vpack.c.b16 %v163, %v162
    %v183 = vpack.c.b16 %v165, %v164
    %v184 = vpack.c.b16 %v167, %v166
    %v185 = vpack.c.b16 %v169, %v168
    %202 = vmatpush.bf16.msra.mxu0 %v177
    %203 = vmatpush.bf16.msra.mxu0 %v176
    %204 = vmatpush.bf16.msra.mxu0 %v175
    %205 = vmatpush.bf16.msra.mxu0 %v174
    %206 = vmatpush.bf16.msra.mxu0 %v173
    %207 = vmatpush.bf16.msra.mxu0 %v172
    %208 = vmatpush.bf16.msra.mxu0 %v171
    %209 = vmatpush.bf16.msra.mxu0 %v170
    %210 = vmatmul.bf16.gmra.mxu0 %v102
    %v211 = vpop.f32.mrf.mxu0
    %v212 = vadd.f32 0.0, %v211
    %v213 = vpop.f32.mrf.mxu0
    %v214 = vadd.f32 0.0, %v213
    %215 = vdwg.mxu0
    %216 = vmatpush.bf16.msra.mxu0 %v185
    %217 = vmatpush.bf16.msra.mxu0 %v184
    %218 = vmatpush.bf16.msra.mxu0 %v183
    %219 = vmatpush.bf16.msra.mxu0 %v182
    %220 = vmatpush.bf16.msra.mxu0 %v181
    %221 = vmatpush.bf16.msra.mxu0 %v180
    %222 = vmatpush.bf16.msra.mxu0 %v179
    %223 = vmatpush.bf16.msra.mxu0 %v178
    %224 = vmatmul.bf16.gmra.mxu0 %v103
    %v225 = vpop.f32.mrf.mxu0
    %v226 = vadd.f32 %v212, %v225
    %v227 = vpop.f32.mrf.mxu0
    %v228 = vadd.f32 %v214, %v227
    %229 = vdwg.mxu0
    %v230 = vld [vmem:[#allocation7] sm:$0xf]
    %v231 = vld [vmem:[#allocation7 + $0x4] sm:$0xf]
    %v232 = vld [vmem:[#allocation7 + $0x8] sm:$0xf]
    %v233 = vld [vmem:[#allocation7 + $0xc] sm:$0xf]
    %v234 = vld [vmem:[#allocation7 + $0x10] sm:$0xf]
    %v235 = vld [vmem:[#allocation7 + $0x14] sm:$0xf]
    %v236 = vld [vmem:[#allocation7 + $0x18] sm:$0xf]
    %v237 = vld [vmem:[#allocation7 + $0x1c] sm:$0xf]
    %v238 = vld [vmem:[#allocation7 + $0x20] sm:$0xf]
    %v239 = vld [vmem:[#allocation7 + $0x24] sm:$0xf]
    %v240 = vld [vmem:[#allocation7 + $0x28] sm:$0xf]
    %v241 = vld [vmem:[#allocation7 + $0x2c] sm:$0xf]
    %v242 = vld [vmem:[#allocation7 + $0x30] sm:$0xf]
    %v243 = vld [vmem:[#allocation7 + $0x34] sm:$0xf]
    %v244 = vld [vmem:[#allocation7 + $0x38] sm:$0xf]
    %v245 = vld [vmem:[#allocation7 + $0x3c] sm:$0xf]
    %v246 = vld [vmem:[#allocation7 + $0x40] sm:$0xf]
    %v247 = vld [vmem:[#allocation7 + $0x44] sm:$0xf]
    %v248 = vld [vmem:[#allocation7 + $0x48] sm:$0xf]
    %v249 = vld [vmem:[#allocation7 + $0x4c] sm:$0xf]
    %v250 = vld [vmem:[#allocation7 + $0x50] sm:$0xf]
    %v251 = vld [vmem:[#allocation7 + $0x54] sm:$0xf]
    %v252 = vld [vmem:[#allocation7 + $0x58] sm:$0xf]
    %v253 = vld [vmem:[#allocation7 + $0x5c] sm:$0xf]
    %v254 = vld [vmem:[#allocation7 + $0x60] sm:$0xf]
    %v255 = vld [vmem:[#allocation7 + $0x64] sm:$0xf]
    %v256 = vld [vmem:[#allocation7 + $0x68] sm:$0xf]
    %v257 = vld [vmem:[#allocation7 + $0x6c] sm:$0xf]
    %v258 = vld [vmem:[#allocation7 + $0x70] sm:$0xf]
    %v259 = vld [vmem:[#allocation7 + $0x74] sm:$0xf]
    %v260 = vld [vmem:[#allocation7 + $0x78] sm:$0xf]
    %v261 = vld [vmem:[#allocation7 + $0x7c] sm:$0xf]
    %v294 = vunpack.c.l.b16 %v230
    %v295 = vunpack.c.l.b16 %v231
    %v296 = vunpack.c.l.b16 %v232
    %v297 = vunpack.c.l.b16 %v233
    %v298 = vunpack.c.l.b16 %v234
    %v299 = vunpack.c.l.b16 %v235
    %v300 = vunpack.c.l.b16 %v236
    %v301 = vunpack.c.l.b16 %v237
    %v302 = vunpack.c.l.b16 %v238
    %v303 = vunpack.c.l.b16 %v239
    %v304 = vunpack.c.l.b16 %v240
    %v305 = vunpack.c.l.b16 %v241
    %v306 = vunpack.c.l.b16 %v242
    %v307 = vunpack.c.l.b16 %v243
    %v308 = vunpack.c.l.b16 %v244
    %v309 = vunpack.c.l.b16 %v245
    %v310 = vunpack.c.l.b16 %v246
    %v311 = vunpack.c.l.b16 %v247
    %v312 = vunpack.c.l.b16 %v248
    %v313 = vunpack.c.l.b16 %v249
    %v314 = vunpack.c.l.b16 %v250
    %v315 = vunpack.c.l.b16 %v251
    %v316 = vunpack.c.l.b16 %v252
    %v317 = vunpack.c.l.b16 %v253
    %v318 = vunpack.c.l.b16 %v254
    %v319 = vunpack.c.l.b16 %v255
    %v320 = vunpack.c.l.b16 %v256
    %v321 = vunpack.c.l.b16 %v257
    %v322 = vunpack.c.l.b16 %v258
    %v323 = vunpack.c.l.b16 %v259
    %v324 = vunpack.c.l.b16 %v260
    %v325 = vunpack.c.l.b16 %v261
    %v326 = vpack.c.b16 %v295, %v294
    %v327 = vpack.c.b16 %v297, %v296
    %v328 = vpack.c.b16 %v299, %v298
    %v329 = vpack.c.b16 %v301, %v300
    %v330 = vpack.c.b16 %v303, %v302
    %v331 = vpack.c.b16 %v305, %v304
    %v332 = vpack.c.b16 %v307, %v306
    %v333 = vpack.c.b16 %v309, %v308
    %v334 = vpack.c.b16 %v311, %v310
    %v335 = vpack.c.b16 %v313, %v312
    %v336 = vpack.c.b16 %v315, %v314
    %v337 = vpack.c.b16 %v317, %v316
    %v338 = vpack.c.b16 %v319, %v318
    %v339 = vpack.c.b16 %v321, %v320
    %v340 = vpack.c.b16 %v323, %v322
    %v341 = vpack.c.b16 %v325, %v324
    %358 = vmatpush.bf16.msra.mxu0 %v333
    %359 = vmatpush.bf16.msra.mxu0 %v332
    %360 = vmatpush.bf16.msra.mxu0 %v331
    %361 = vmatpush.bf16.msra.mxu0 %v330
    %362 = vmatpush.bf16.msra.mxu0 %v329
    %363 = vmatpush.bf16.msra.mxu0 %v328
    %364 = vmatpush.bf16.msra.mxu0 %v327
    %365 = vmatpush.bf16.msra.mxu0 %v326
    %366 = vmatmul.bf16.gmra.mxu0 %v102
    %v367 = vpop.f32.mrf.mxu0
    %v368 = vadd.f32 0.0, %v367
    %v369 = vpop.f32.mrf.mxu0
    %v370 = vadd.f32 0.0, %v369
    %371 = vdwg.mxu0
    %372 = vmatpush.bf16.msra.mxu0 %v341
    %373 = vmatpush.bf16.msra.mxu0 %v340
    %374 = vmatpush.bf16.msra.mxu0 %v339
    %375 = vmatpush.bf16.msra.mxu0 %v338
    %376 = vmatpush.bf16.msra.mxu0 %v337
    %377 = vmatpush.bf16.msra.mxu0 %v336
    %378 = vmatpush.bf16.msra.mxu0 %v335
    %379 = vmatpush.bf16.msra.mxu0 %v334
    %380 = vmatmul.bf16.gmra.mxu0 %v103
    %v381 = vpop.f32.mrf.mxu0
    %v382 = vadd.f32 %v368, %v381
    %v383 = vpop.f32.mrf.mxu0
    %v384 = vadd.f32 %v370, %v383
    %385 = vdwg.mxu0
    %v386 = vmul.f32 %v226, %v226
    %v387 = vmul.f32 %v228, %v228
    %v388 = vmul.f32 %v382, %v382
    %v389 = vmul.f32 %v384, %v384
    %v390 = vadd.f32 %v386, %v388
    %v391 = vadd.f32 %v387, %v389
    %v392 = vmax.f32 %v390, 1e-30
    %v393 = vmax.f32 %v391, 1e-30
    %v394 = vrsqrt.pop %v392
    %v395 = vmul.f32 %v394, %v392
    %v396 = vmul.f32 %v395, %v394
    %v397 = vmul.f32 0.5, %v396
    %v398 = vsub.f32 1.5, %v397
    %v399 = vmul.f32 %v394, %v398
    %vm400 = vweird.f32 %v392
    %vm401 = vweird.f32 %v394
    %vm402 = vmor %vm400, %vm401
    %v403 = vsel %vm402, %v394, %v399
    %v404 = vrsqrt.pop %v393
    %v405 = vmul.f32 %v404, %v393
    %v406 = vmul.f32 %v405, %v404
    %v407 = vmul.f32 0.5, %v406
    %v408 = vsub.f32 1.5, %v407
    %v409 = vmul.f32 %v404, %v408
    %vm410 = vweird.f32 %v393
    %vm411 = vweird.f32 %v404
    %vm412 = vmor %vm410, %vm411
    %v413 = vsel %vm412, %v404, %v409
    %v414 = vmul.f32 %v390, %v403
    %v415 = vmul.f32 %v391, %v413
    %416 = vst [vmem:[#allocation8] sm:$0xff] %v414
    %417 = vst [vmem:[#allocation8 + $0x8] sm:$0xff] %v415
    // Predicated region
    $region26: #{tpu_custom_call.1} parent=1 // pred_check
      _
    $region27: #{tpu_custom_call.1} parent=1 // pred_check_branch
      %419 = sbr.rel (0) target = $region29
    $region28: #{tpu_custom_call.1} parent=1 // pred_region
      %421 = vsyncadd [#allocation4], 0
      %s422 = sshll.u32 [#allocation8], 4
      %s423 = int_to_ptr.vmem [resolvable:$true] %s422
      %s424 = sshll.u32 %s3, 4
      %s425 = int_to_ptr.hbm [resolvable:$true] %s424
      %430 = dma.vmem_to_hbm [thread:$0]  %s423, 256, %s425, [#allocation4], 128, 128, 8
    $region29: #{tpu_custom_call.1} parent=1 // pred_fallthru
      _
    // Predicated region
    $region30: #{tpu_custom_call.1} parent=1 // pred_check
      _
    $region31: #{tpu_custom_call.1} parent=1 // pred_check_branch
      %432 = sbr.rel (0) target = $region33
    $region32: #{tpu_custom_call.1} parent=1 // pred_region
      %434 = dma.done [#allocation4], 256
    $region33: #{tpu_custom_call.1} parent=1 // pred_fallthru
      _
    %435 = vsyncpa [#allocation3], 1
    %436 = vsyncpa [#allocation6], 1
    %437 = vsyncpa [#allocation4], 1

</llo_original>
